<compile_context>
chip_gen: v7x
topology: tpu7x:2x2x1
jax: 0.10.0
libtpu: 0.0.40
codegen_flags: <defaults>
</compile_context>

<pallas_src>
import functools
import math

import jax
import jax.numpy as jnp
from jax.experimental import pallas as pl
from jax.experimental.pallas import tpu as pltpu

LOG_SIG_MIN = -20.0
LOG_SIG_MAX = 2.0
EPSILON = 1e-6
_HALF_LOG_2PI = 0.5 * math.log(2.0 * math.pi)

LANE = 128      # lane width (last-dim granularity)
SUBLANE = 8     # sublane width (second-to-last-dim granularity)


def _cdiv(a, b):
    return -(-a // b)


def _round_up(n, m):
    return _cdiv(n, m) * m


# ----------------------------------------------------------------------------
# Kernels
# ----------------------------------------------------------------------------
def actor_sac_fwd_kernel(x_ref, w1_ref, b1_ref, w2_ref, b2_ref, wh_ref, bh_ref,
                         out_ref):
    """One batch tile of forward(): out[:, :A] = mean, out[:, A:] = clip(log_std).

    x_ref:  (TB, OBS_P)   bf16
    w*_ref: padded weights (in, out) bf16; b*_ref: (1, out) f32
    wh/bh:  fused heads -- columns [0, ACT_P) = mean, [ACT_P, 2*ACT_P) = log_std
    out_ref: (TB, 2*ACT_P) fused, lane-dense output slab
    """
    head_p = out_ref.shape[-1]
    act_p = head_p // 2

    # fc1 + ReLU (bf16 MXU, f32 accumulate, f32 elementwise)
    h1 = jnp.dot(x_ref[...], w1_ref[...], preferred_element_type=jnp.float32)
    h1 = jnp.maximum(h1 + b1_ref[...], 0.0)

    # fc2 + ReLU
    h2 = jnp.dot(h1.astype(w2_ref.dtype), w2_ref[...],
                 preferred_element_type=jnp.float32)
    h2 = jnp.maximum(h2 + b2_ref[...], 0.0)

    # fused mean / log_std heads: one MXU pass.
    head = jnp.dot(h2.astype(wh_ref.dtype), wh_ref[...],
                   preferred_element_type=jnp.float32) + bh_ref[...]

    # Clamp only the log_std half via a lane mask (stays f32: v5e has no bf16
    # VPU), then one lane-dense store of the fused (mean | log_std) slab.
    col = jax.lax.broadcasted_iota(jnp.int32, head.shape, dimension=1)
    head = jnp.where(col >= act_p,
                     jnp.clip(head, LOG_SIG_MIN, LOG_SIG_MAX),
                     head)
    out_ref[...] = head.astype(out_ref.dtype)


def actor_sac_sample_kernel(x_ref, eps_ref, w1_ref, b1_ref, w2_ref, b2_ref,
                            wh_ref, bh_ref, act_ref, logp_ref, *, act_dim):
    """Fused SAC sample(): action = tanh(mean + std*eps), log_prob, tanh(mean).

    eps_ref: (TB, ACT_P) standard-normal noise (rsample randomness), f32.
    act_ref: (TB, 2*ACT_P) -- [:, :ACT_P] = action, [:, ACT_P:] = tanh(mean).
    logp_ref: (TB, 1) summed log-prob with tanh correction.
    exp/tanh/log run on the EUP slot (idle during the MXU/VALU work above).
    """
    act_p = eps_ref.shape[-1]

    h1 = jnp.dot(x_ref[...], w1_ref[...], preferred_element_type=jnp.float32)
    h1 = jnp.maximum(h1 + b1_ref[...], 0.0)
    h2 = jnp.dot(h1.astype(w2_ref.dtype), w2_ref[...],
                 preferred_element_type=jnp.float32)
    h2 = jnp.maximum(h2 + b2_ref[...], 0.0)
    head = jnp.dot(h2.astype(wh_ref.dtype), wh_ref[...],
                   preferred_element_type=jnp.float32) + bh_ref[...]

    mean = head[:, :act_p]
    log_std = jnp.clip(head[:, act_p:], LOG_SIG_MIN, LOG_SIG_MAX)
    std = jnp.exp(log_std)

    eps = eps_ref[...].astype(jnp.float32)
    x_t = mean + std * eps                       # reparameterized rsample
    action = jnp.tanh(x_t)

    # Normal(mean, std).log_prob(x_t) = -eps^2/2 - log_std - 0.5*log(2*pi)
    lp = -0.5 * eps * eps - log_std - _HALF_LOG_2PI
    lp = lp - jnp.log(1.0 - action * action + EPSILON)   # tanh correction
    col = jax.lax.broadcasted_iota(jnp.int32, lp.shape, dimension=1)
    lp = jnp.where(col < act_dim, lp, 0.0)                # mask padded lanes
    logp_ref[...] = jnp.sum(lp, axis=-1, keepdims=True)

    # Lane-aligned 128-wide halves -> two unmasked stores.
    act_ref[:, :act_p] = action.astype(act_ref.dtype)
    act_ref[:, act_p:] = jnp.tanh(mean).astype(act_ref.dtype)


# ----------------------------------------------------------------------------
# One-time parameter packing (hoisted out of the per-call forward path)
# ----------------------------------------------------------------------------
def pack_actor_params(params, *, compute_dtype=jnp.bfloat16):
    """Pad/cast/fuse the (in,out) weights ONCE. Call at init, outside the jitted
    step, so the per-call forward only pads x and launches the kernel."""
    obs_dim, hidden_dim = params["w1"].shape
    act_dim = params["wm"].shape[1]
    obs_p = _round_up(obs_dim, LANE)
    # 128-lane alignment is enough for v5e's 4x128^2 MXU; typical large hiddens
    # (>=1024) are already multiples of 256 for v6e/v7x's 2x256^2 MXU.
    hid_p = _round_up(hidden_dim, LANE)
    act_p = _round_up(act_dim, LANE)

    f32 = jnp.float32
    w1 = jnp.zeros((obs_p, hid_p), f32).at[:obs_dim, :hidden_dim].set(
        params["w1"]).astype(compute_dtype)
    b1 = jnp.zeros((1, hid_p), f32).at[:, :hidden_dim].set(params["b1"])
    w2 = jnp.zeros((hid_p, hid_p), f32).at[:hidden_dim, :hidden_dim].set(
        params["w2"]).astype(compute_dtype)
    b2 = jnp.zeros((1, hid_p), f32).at[:, :hidden_dim].set(params["b2"])

    wm = jnp.zeros((hid_p, act_p), f32).at[:hidden_dim, :act_dim].set(params["wm"])
    ws = jnp.zeros((hid_p, act_p), f32).at[:hidden_dim, :act_dim].set(params["ws"])
    wh = jnp.concatenate([wm, ws], axis=1).astype(compute_dtype)   # (hid_p, 2*act_p)
    bm = jnp.zeros((1, act_p), f32).at[:, :act_dim].set(params["bm"])
    bs = jnp.zeros((1, act_p), f32).at[:, :act_dim].set(params["bs"])
    bh = jnp.concatenate([bm, bs], axis=1)                         # (1, 2*act_p)

    return {"w1": w1, "b1": b1, "w2": w2, "b2": b2, "wh": wh, "bh": bh}


# ----------------------------------------------------------------------------
# Tiling / budget helpers
# ----------------------------------------------------------------------------
def _batch_tiling(B, block_b):
    """Balanced batch tiles: padding waste < SUBLANE rows per tile, and >= 2
    grid steps when there is enough work (v7x megacore sharding + DMA overlap)."""
    n_tiles = max(1, _cdiv(B, block_b))
    if n_tiles == 1 and B >= 2 * 128:
        n_tiles = 2
    tb = _round_up(_cdiv(B, n_tiles), SUBLANE)
    return tb, n_tiles * tb, n_tiles


def _vmem_limit_bytes(tb, obs_p, hid_p, head_p, compute_dtype, out_dtype):
    """Explicit scoped-VMEM budget: the v5e default (16 MiB) is too small for
    large hidden dims; cap at 64 MiB (v7x physical VMEM per TensorCore)."""
    cd = jnp.dtype(compute_dtype).itemsize
    od = jnp.dtype(out_dtype).itemsize
    weights = ((obs_p * hid_p + hid_p * hid_p + hid_p * head_p) * cd
               + (2 * hid_p + head_p) * 4)
    io_tile = tb * obs_p * cd + tb * head_p * od + tb * head_p * 4
    interm = tb * hid_p * (4 + cd) * 2 + tb * head_p * 4
    est = 2 * (weights + io_tile) + interm        # inputs/outputs double-buffered
    return int(min(64 << 20, max(32 << 20, 2 * est)))
    # TODO(synk): for hidden_dim >= ~1024 on v5e, single-buffer the constant
    # weight BlockSpecs (pipeline_mode=pl.Buffered(1)) to halve resident VMEM.


def _weight_specs(obs_p, hid_p, head_p):
    const = lambda i: (0, 0)   # weights/biases stay VMEM-resident across steps
    return [
        pl.BlockSpec((obs_p, hid_p), const),   # w1
        pl.BlockSpec((1, hid_p), const),       # b1
        pl.BlockSpec((hid_p, hid_p), const),   # w2
        pl.BlockSpec((1, hid_p), const),       # b2
        pl.BlockSpec((hid_p, head_p), const),  # wh (fused heads)
        pl.BlockSpec((1, head_p), const),      # bh
    ]


# ----------------------------------------------------------------------------
# Wrappers
# ----------------------------------------------------------------------------
def mlp_actor_sac_forward(x, packed, *, act_dim, block_b=512,
                          out_dtype=jnp.bfloat16):
    """forward(): returns (mean [B, act_dim], log_std [B, act_dim]) in f32.

    `packed` must come from pack_actor_params (padded bf16 weights, fused head).
    """
    B, obs_dim = x.shape
    compute_dtype = packed["w1"].dtype
    obs_p, hid_p = packed["w1"].shape
    head_p = packed["wh"].shape[1]
    act_p = head_p // 2

    tb, b_pad, n_tiles = _batch_tiling(B, block_b)
    xp = jnp.zeros((b_pad, obs_p), compute_dtype).at[:B, :obs_dim].set(
        x.astype(compute_dtype))

    flops = 2 * b_pad * (obs_p * hid_p + hid_p * hid_p + hid_p * head_p)
    bytes_accessed = (xp.size * xp.dtype.itemsize
                      + sum(v.size * v.dtype.itemsize for v in packed.values())
                      + b_pad * head_p * jnp.dtype(out_dtype).itemsize)

    out = pl.pallas_call(
        actor_sac_fwd_kernel,
        out_shape=jax.ShapeDtypeStruct((b_pad, head_p), out_dtype),
        grid=(n_tiles,),
        in_specs=[pl.BlockSpec((tb, obs_p), lambda i: (i, 0))]
                 + _weight_specs(obs_p, hid_p, head_p),
        out_specs=pl.BlockSpec((tb, head_p), lambda i: (i, 0)),
        compiler_params=pltpu.CompilerParams(
            dimension_semantics=("parallel",),
            vmem_limit_bytes=_vmem_limit_bytes(tb, obs_p, hid_p, head_p,
                                               compute_dtype, out_dtype)),
        cost_estimate=pl.CostEstimate(flops=flops, transcendentals=0,
                                      bytes_accessed=bytes_accessed),
    )(xp, packed["w1"], packed["b1"], packed["w2"], packed["b2"],
      packed["wh"], packed["bh"])

    mean = out[:B, :act_dim].astype(jnp.float32)
    log_std = out[:B, act_p:act_p + act_dim].astype(jnp.float32)
    return mean, log_std


def mlp_actor_sac_sample(x, eps, packed, *, act_dim, block_b=512):
    """sample(): returns (action, log_prob [B,1], tanh(mean)) in f32.

    eps: [B, act_dim] standard-normal noise (the rsample randomness), generated
    outside so the kernel stays pure/deterministic.
    """
    B, obs_dim = x.shape
    compute_dtype = packed["w1"].dtype
    obs_p, hid_p = packed["w1"].shape
    head_p = packed["wh"].shape[1]
    act_p = head_p // 2

    tb, b_pad, n_tiles = _batch_tiling(B, block_b)
    xp = jnp.zeros((b_pad, obs_p), compute_dtype).at[:B, :obs_dim].set(
        x.astype(compute_dtype))
    epsp = jnp.zeros((b_pad, act_p), jnp.float32).at[:B, :act_dim].set(
        eps.astype(jnp.float32))

    flops = 2 * b_pad * (obs_p * hid_p + hid_p * hid_p + hid_p * head_p)
    transcendentals = 4 * b_pad * act_p   # exp + 2*tanh + log per lane (approx)
    bytes_accessed = (xp.size * xp.dtype.itemsize + epsp.size * 4
                      + sum(v.size * v.dtype.itemsize for v in packed.values())
                      + b_pad * head_p * 4 + b_pad * 4)

    slab, logp = pl.pallas_call(
        functools.partial(actor_sac_sample_kernel, act_dim=act_dim),
        out_shape=(jax.ShapeDtypeStruct((b_pad, head_p), jnp.float32),
                   jax.ShapeDtypeStruct((b_pad, 1), jnp.float32)),
        grid=(n_tiles,),
        in_specs=[pl.BlockSpec((tb, obs_p), lambda i: (i, 0)),
                  pl.BlockSpec((tb, act_p), lambda i: (i, 0))]
                 + _weight_specs(obs_p, hid_p, head_p),
        out_specs=(pl.BlockSpec((tb, head_p), lambda i: (i, 0)),
                   pl.BlockSpec((tb, 1), lambda i: (i, 0))),
        compiler_params=pltpu.CompilerParams(
            dimension_semantics=("parallel",),
            vmem_limit_bytes=_vmem_limit_bytes(tb, obs_p, hid_p, head_p,
                                               compute_dtype, jnp.float32)),
        cost_estimate=pl.CostEstimate(flops=flops,
                                      transcendentals=transcendentals,
                                      bytes_accessed=bytes_accessed),
    )(xp, epsp, packed["w1"], packed["b1"], packed["w2"], packed["b2"],
      packed["wh"], packed["bh"])
    # TODO(synk): eps could also be drawn in-kernel via pltpu.prng_seed /
    # pltpu.stateful_normal to drop the eps HBM stream entirely.

    action = slab[:B, :act_dim]
    mean_tanh = slab[:B, act_p:act_p + act_dim]
    log_prob = logp[:B, :]
    return action, log_prob, mean_tanh


# ----------------------------------------------------------------------------
# Init (matches torch xavier_uniform_ weights / zero biases; stored (in, out))
# ----------------------------------------------------------------------------
def xavier_uniform(key, in_dim, out_dim, gain=1.0):
    bound = gain * jnp.sqrt(6.0 / (in_dim + out_dim))
    return jax.random.uniform(key, (in_dim, out_dim), jnp.float32, -bound, bound)


def init_params(key, obs_dim, hidden_dim, action_dim):
    k1, k2, k3, k4 = jax.random.split(key, 4)
    return {
        "w1": xavier_uniform(k1, obs_dim, hidden_dim),
        "b1": jnp.zeros((1, hidden_dim), jnp.float32),
        "w2": xavier_uniform(k2, hidden_dim, hidden_dim),
        "b2": jnp.zeros((1, hidden_dim), jnp.float32),
        "wm": xavier_uniform(k3, hidden_dim, action_dim),
        "bm": jnp.zeros((1, action_dim), jnp.float32),
        "ws": xavier_uniform(k4, hidden_dim, action_dim),
        "bs": jnp.zeros((1, action_dim), jnp.float32),
    }


if __name__ == "__main__":
    batch, obs_dim, hidden_dim, action_dim = 2, 16, 32, 8
    compute_dtype = jnp.bfloat16

    key = jax.random.PRNGKey(0)
    k_x, k_p, k_e = jax.random.split(key, 3)
    x = jax.random.normal(k_x, (batch, obs_dim), jnp.float32)
    params = init_params(k_p, obs_dim, hidden_dim, action_dim)
    eps = jax.random.normal(k_e, (batch, action_dim), jnp.float32)

    # One-time packing, hoisted out of the per-step forward path.
    packed = jax.block_until_ready(
        pack_actor_params(params, compute_dtype=compute_dtype))

    fwd = jax.jit(functools.partial(mlp_actor_sac_forward, act_dim=action_dim))
    smp = jax.jit(functools.partial(mlp_actor_sac_sample, act_dim=action_dim))

    mean, log_std = fwd(x, packed)
    action, log_prob, mean_tanh = smp(x, eps, packed)
    jax.block_until_ready((mean, log_std, action, log_prob, mean_tanh))

    # Pure-JAX reference with matching dtype handling (bf16 matmuls, f32 rest).
    def ref_forward(xx):
        xc = xx.astype(compute_dtype)
        h1 = jnp.maximum(
            jnp.dot(xc, params["w1"].astype(compute_dtype),
                    preferred_element_type=jnp.float32) + params["b1"], 0.0)
        h2 = jnp.maximum(
            jnp.dot(h1.astype(compute_dtype), params["w2"].astype(compute_dtype),
                    preferred_element_type=jnp.float32) + params["b2"], 0.0)
        m = jnp.dot(h2.astype(compute_dtype), params["wm"].astype(compute_dtype),
                    preferred_element_type=jnp.float32) + params["bm"]
        ls = jnp.clip(
            jnp.dot(h2.astype(compute_dtype), params["ws"].astype(compute_dtype),
                    preferred_element_type=jnp.float32) + params["bs"],
            LOG_SIG_MIN, LOG_SIG_MAX)
        return m, ls

    mean_r, log_std_r = ref_forward(x)
    std_r = jnp.exp(log_std_r)
    x_t_r = mean_r + std_r * eps
    action_r = jnp.tanh(x_t_r)
    lp_r = (-0.5 * eps * eps - log_std_r - _HALF_LOG_2PI
            - jnp.log(1.0 - action_r * action_r + EPSILON))
    log_prob_r = jnp.sum(lp_r, axis=1, keepdims=True)
    mean_tanh_r = jnp.tanh(mean_r)

    tol = dict(atol=2e-2, rtol=2e-2)   # bf16 output / bf16 MXU path
    assert mean.shape == (batch, action_dim)
    assert log_std.shape == (batch, action_dim)
    assert action.shape == (batch, action_dim)
    assert log_prob.shape == (batch, 1)
    assert mean_tanh.shape == (batch, action_dim)
    assert jnp.allclose(mean, mean_r, **tol), "mean mismatch"
    assert jnp.allclose(log_std, log_std_r, **tol), "log_std mismatch"
    assert jnp.allclose(action, action_r, **tol), "action mismatch"
    assert jnp.allclose(mean_tanh, mean_tanh_r, **tol), "tanh(mean) mismatch"
    assert jnp.allclose(log_prob, log_prob_r, atol=5e-2, rtol=5e-2), "log_prob mismatch"

    print("KERNEL_OK")
</pallas_src>

<mosaic_0001>
module attributes {stable_mosaic.version = 11 : i64} {
  func.func @actor_sac_fwd_kernel(%arg0: i32, %arg1: memref<8x128xbf16, #tpu.memory_space<vmem>>, %arg2: memref<128x128xbf16, #tpu.memory_space<vmem>>, %arg3: memref<1x128xf32, #tpu.memory_space<vmem>>, %arg4: memref<128x128xbf16, #tpu.memory_space<vmem>>, %arg5: memref<1x128xf32, #tpu.memory_space<vmem>>, %arg6: memref<128x256xbf16, #tpu.memory_space<vmem>>, %arg7: memref<1x256xf32, #tpu.memory_space<vmem>>, %arg8: memref<8x256xbf16, #tpu.memory_space<vmem>>) attributes {dimension_semantics = [#tpu.dimension_semantics<parallel>], iteration_bounds = array<i64: 1>, scalar_prefetch = 0 : i64, scratch_operands = 0 : i64, tpu.core_type = #tpu.core_type<tc>, window_params = [{transform_indices = @transform_0, window_bounds = array<i64: 8, 128>}, {pipeline_mode = #tpu.pipeline_mode<synchronous>, transform_indices = @transform_1, window_bounds = array<i64: 128, 128>}, {pipeline_mode = #tpu.pipeline_mode<synchronous>, transform_indices = @transform_2, window_bounds = array<i64: 1, 128>}, {pipeline_mode = #tpu.pipeline_mode<synchronous>, transform_indices = @transform_3, window_bounds = array<i64: 128, 128>}, {pipeline_mode = #tpu.pipeline_mode<synchronous>, transform_indices = @transform_4, window_bounds = array<i64: 1, 128>}, {pipeline_mode = #tpu.pipeline_mode<synchronous>, transform_indices = @transform_5, window_bounds = array<i64: 128, 256>}, {pipeline_mode = #tpu.pipeline_mode<synchronous>, transform_indices = @transform_6, window_bounds = array<i64: 1, 256>}, {transform_indices = @transform_7, window_bounds = array<i64: 8, 256>}]} {
    %c0 = arith.constant 0 : index
    %c0_0 = arith.constant 0 : index
    %0 = vector.load %arg1[%c0, %c0_0] : memref<8x128xbf16, #tpu.memory_space<vmem>>, vector<8x128xbf16>
    %c0_1 = arith.constant 0 : index
    %c0_2 = arith.constant 0 : index
    %1 = vector.load %arg2[%c0_1, %c0_2] : memref<128x128xbf16, #tpu.memory_space<vmem>>, vector<128x128xbf16>
    %cst = arith.constant dense<0.000000e+00> : vector<8x128xf32>
    %2 = tpu.matmul %0, %1, %cst {dimension_numbers = #tpu.dot_dimension_numbers<[1], [0], [0], [1], [0, 0, 1, 1], [], []>} : vector<8x128xbf16>, vector<128x128xbf16>, vector<8x128xf32> -> vector<8x128xf32>
    %c0_3 = arith.constant 0 : index
    %c0_4 = arith.constant 0 : index
    %3 = vector.load %arg3[%c0_3, %c0_4] : memref<1x128xf32, #tpu.memory_space<vmem>>, vector<1x128xf32>
    %4 = vector.broadcast %3 : vector<1x128xf32> to vector<8x128xf32>
    %5 = arith.addf %2, %4 : vector<8x128xf32>
    %cst_5 = arith.constant 0.000000e+00 : f32
    %6 = vector.broadcast %cst_5 : f32 to vector<8x128xf32>
    %7 = arith.maximumf %5, %6 : vector<8x128xf32>
    %8 = arith.truncf %7 : vector<8x128xf32> to vector<8x128xbf16>
    %c0_6 = arith.constant 0 : index
    %c0_7 = arith.constant 0 : index
    %9 = vector.load %arg4[%c0_6, %c0_7] : memref<128x128xbf16, #tpu.memory_space<vmem>>, vector<128x128xbf16>
    %cst_8 = arith.constant dense<0.000000e+00> : vector<8x128xf32>
    %10 = tpu.matmul %8, %9, %cst_8 {dimension_numbers = #tpu.dot_dimension_numbers<[1], [0], [0], [1], [0, 0, 1, 1], [], []>} : vector<8x128xbf16>, vector<128x128xbf16>, vector<8x128xf32> -> vector<8x128xf32>
    %c0_9 = arith.constant 0 : index
    %c0_10 = arith.constant 0 : index
    %11 = vector.load %arg5[%c0_9, %c0_10] : memref<1x128xf32, #tpu.memory_space<vmem>>, vector<1x128xf32>
    %12 = vector.broadcast %11 : vector<1x128xf32> to vector<8x128xf32>
    %13 = arith.addf %10, %12 : vector<8x128xf32>
    %cst_11 = arith.constant 0.000000e+00 : f32
    %14 = vector.broadcast %cst_11 : f32 to vector<8x128xf32>
    %15 = arith.maximumf %13, %14 : vector<8x128xf32>
    %16 = arith.truncf %15 : vector<8x128xf32> to vector<8x128xbf16>
    %c0_12 = arith.constant 0 : index
    %c0_13 = arith.constant 0 : index
    %17 = vector.load %arg6[%c0_12, %c0_13] : memref<128x256xbf16, #tpu.memory_space<vmem>>, vector<128x256xbf16>
    %cst_14 = arith.constant dense<0.000000e+00> : vector<8x256xf32>
    %18 = tpu.matmul %16, %17, %cst_14 {dimension_numbers = #tpu.dot_dimension_numbers<[1], [0], [0], [1], [0, 0, 1, 1], [], []>} : vector<8x128xbf16>, vector<128x256xbf16>, vector<8x256xf32> -> vector<8x256xf32>
    %c0_15 = arith.constant 0 : index
    %c0_16 = arith.constant 0 : index
    %19 = vector.load %arg7[%c0_15, %c0_16] : memref<1x256xf32, #tpu.memory_space<vmem>>, vector<1x256xf32>
    %20 = vector.broadcast %19 : vector<1x256xf32> to vector<8x256xf32>
    %21 = arith.addf %18, %20 : vector<8x256xf32>
    %22 = tpu.iota {dimensions = array<i32: 1>} : vector<8x256xi32>
    %c128_i32 = arith.constant 128 : i32
    %23 = vector.broadcast %c128_i32 : i32 to vector<8x256xi32>
    %24 = arith.cmpi sge, %22, %23 : vector<8x256xi32>
    %cst_17 = arith.constant -2.000000e+01 : f32
    %cst_18 = arith.constant 2.000000e+00 : f32
    %25 = vector.broadcast %cst_17 : f32 to vector<8x256xf32>
    %26 = arith.maximumf %25, %21 : vector<8x256xf32>
    %27 = vector.broadcast %cst_18 : f32 to vector<8x256xf32>
    %28 = arith.minimumf %27, %26 : vector<8x256xf32>
    %29 = arith.select %24, %28, %21 : vector<8x256xi1>, vector<8x256xf32>
    %30 = arith.truncf %29 : vector<8x256xf32> to vector<8x256xbf16>
    %c0_19 = arith.constant 0 : index
    %c0_20 = arith.constant 0 : index
    %31 = vector.load %arg8[%c0_19, %c0_20] : memref<8x256xbf16, #tpu.memory_space<vmem>>, vector<8x256xbf16>
    tpu.vector_store %arg8[%c0_19, %c0_20], %30 {strides = array<i32>} : memref<8x256xbf16, #tpu.memory_space<vmem>>, vector<8x256xbf16>,
    return
  }
  func.func @transform_0(%arg0: i32) -> (i32, i32) {
    %c0_i32 = arith.constant 0 : i32
    %c0_i32_0 = arith.constant 0 : i32
    return %arg0, %c0_i32 : i32, i32
  }
  func.func @transform_1(%arg0: i32) -> (i32, i32) {
    %c0_i32 = arith.constant 0 : i32
    %c0_i32_0 = arith.constant 0 : i32
    %c0_i32_1 = arith.constant 0 : i32
    return %c0_i32, %c0_i32_0 : i32, i32
  }
  func.func @transform_2(%arg0: i32) -> (i32, i32) {
    %c0_i32 = arith.constant 0 : i32
    %c0_i32_0 = arith.constant 0 : i32
    %c0_i32_1 = arith.constant 0 : i32
    return %c0_i32, %c0_i32_0 : i32, i32
  }
  func.func @transform_3(%arg0: i32) -> (i32, i32) {
    %c0_i32 = arith.constant 0 : i32
    %c0_i32_0 = arith.constant 0 : i32
    %c0_i32_1 = arith.constant 0 : i32
    return %c0_i32, %c0_i32_0 : i32, i32
  }
  func.func @transform_4(%arg0: i32) -> (i32, i32) {
    %c0_i32 = arith.constant 0 : i32
    %c0_i32_0 = arith.constant 0 : i32
    %c0_i32_1 = arith.constant 0 : i32
    return %c0_i32, %c0_i32_0 : i32, i32
  }
  func.func @transform_5(%arg0: i32) -> (i32, i32) {
    %c0_i32 = arith.constant 0 : i32
    %c0_i32_0 = arith.constant 0 : i32
    %c0_i32_1 = arith.constant 0 : i32
    return %c0_i32, %c0_i32_0 : i32, i32
  }
  func.func @transform_6(%arg0: i32) -> (i32, i32) {
    %c0_i32 = arith.constant 0 : i32
    %c0_i32_0 = arith.constant 0 : i32
    %c0_i32_1 = arith.constant 0 : i32
    return %c0_i32, %c0_i32_0 : i32, i32
  }
  func.func @transform_7(%arg0: i32) -> (i32, i32) {
    %c0_i32 = arith.constant 0 : i32
    %c0_i32_0 = arith.constant 0 : i32
    return %arg0, %c0_i32 : i32, i32
  }
}

</mosaic_0001>

<llo_original>
// kernel: mlp_actor_sac_forward.1
$region0: #{mlp_actor_sac_forward.1}
  #allocation0 [shape = 'u32[]', space=smem, size = 0x4, offset = 0x4, fixed_abs, tag = 'smem constant byte address 0x4 - core index']
  #allocation1 [shape = 'u32[144,128]{1,0:T(1,128)}', space=vmem, size = 0x12000, scoped, tag = 'internal scratch']
  %s0 = inlined_call_operand.vmem [shape: bf16[8,128], index: 0, kind: input, shape index: {}]
  %s1 = inlined_call_operand.hbm [shape: bf16[128,128], index: 1, kind: input, shape index: {}]
  %s2 = inlined_call_operand.vmem [shape: f32[1,128], index: 2, kind: input, shape index: {}]
  %s3 = inlined_call_operand.hbm [shape: bf16[128,128], index: 3, kind: input, shape index: {}]
  %s4 = inlined_call_operand.vmem [shape: f32[1,128], index: 4, kind: input, shape index: {}]
  %s5 = inlined_call_operand.hbm [shape: bf16[128,256], index: 5, kind: input, shape index: {}]
  %s6 = inlined_call_operand.vmem [shape: f32[1,256], index: 6, kind: input, shape index: {}]
  %s7 = inlined_call_operand.vmem [shape: bf16[8,256], index: 7, kind: output, shape index: {}]
  %s8 = sld [smem:[#allocation0]]
  $region50: #{mlp_actor_sac_forward.1} parent=0
    _
  %s10 = ssub.s32 1, %s8
  %s11 = scalar_select 0, %s10, %s8
  $region1: #{mlp_actor_sac_forward.1} parent=0
    #allocation2 [shape = 'u8[32768]{0}', space=vmem, size = 0x8000, scoped, tag = 'input window, operand 1, single buffered']
    #allocation3 [shape = 's32[1]{0}', space=sflag, size = 0x4, scoped, tag = 'scoped memory for mlp_actor_sac_forward.1']
    #allocation4 [shape = 'u8[32768]{0}', space=vmem, size = 0x8000, scoped, tag = 'input window, operand 3, single buffered']
    #allocation5 [shape = 's32[1]{0}', space=sflag, size = 0x4, scoped, tag = 'scoped memory for mlp_actor_sac_forward.1']
    #allocation6 [shape = 'u8[65536]{0}', space=vmem, size = 0x10000, scoped, tag = 'input window, operand 5, single buffered']
    %12 = vsyncpa [#allocation3], 0
    %13 = vsyncpa [#allocation5], 0
    // Predicated region
    $region2: #{mlp_actor_sac_forward.1} parent=1 // pred_check
      _
    $region3: #{mlp_actor_sac_forward.1} parent=1 // pred_check_branch
      %15 = sbr.rel (0) target = $region5
    $region4: #{mlp_actor_sac_forward.1} parent=1 // pred_region
      _
    $region5: #{mlp_actor_sac_forward.1} parent=1 // pred_fallthru
      _
    // Predicated region
    $region6: #{mlp_actor_sac_forward.1} parent=1 // pred_check
      _
    $region7: #{mlp_actor_sac_forward.1} parent=1 // pred_check_branch
      %17 = sbr.rel (0) target = $region9
    $region8: #{mlp_actor_sac_forward.1} parent=1 // pred_region
      %s19 = ssub.s32 1024, 1024
      %20 = vsyncadd [#allocation3], %s19
      %s21 = sshll.u32 [#allocation2], 4
      %s22 = int_to_ptr.vmem [resolvable:$true] %s21
      %27 = dma.hbm_to_vmem [thread:$0]  %s1, 1024, %s22, [#allocation3], 64, 64, 4
    $region9: #{mlp_actor_sac_forward.1} parent=1 // pred_fallthru
      _
    // Predicated region
    $region10: #{mlp_actor_sac_forward.1} parent=1 // pred_check
      _
    $region11: #{mlp_actor_sac_forward.1} parent=1 // pred_check_branch
      %29 = sbr.rel (0) target = $region13
    $region12: #{mlp_actor_sac_forward.1} parent=1 // pred_region
      _
    $region13: #{mlp_actor_sac_forward.1} parent=1 // pred_fallthru
      _
    // Predicated region
    $region14: #{mlp_actor_sac_forward.1} parent=1 // pred_check
      _
    $region15: #{mlp_actor_sac_forward.1} parent=1 // pred_check_branch
      %31 = sbr.rel (0) target = $region17
    $region16: #{mlp_actor_sac_forward.1} parent=1 // pred_region
      %s33 = ssub.s32 1024, 1024
      %34 = vsyncadd [#allocation5], %s33
      %s35 = sshll.u32 [#allocation4], 4
      %s36 = int_to_ptr.vmem [resolvable:$true] %s35
      %41 = dma.hbm_to_vmem [thread:$0]  %s3, 1024, %s36, [#allocation5], 64, 64, 4
    $region17: #{mlp_actor_sac_forward.1} parent=1 // pred_fallthru
      _
    // Predicated region
    $region18: #{mlp_actor_sac_forward.1} parent=1 // pred_check
      _
    $region19: #{mlp_actor_sac_forward.1} parent=1 // pred_check_branch
      %43 = sbr.rel (0) target = $region21
    $region20: #{mlp_actor_sac_forward.1} parent=1 // pred_region
      _
    $region21: #{mlp_actor_sac_forward.1} parent=1 // pred_fallthru
      _
    // Predicated region
    $region22: #{mlp_actor_sac_forward.1} parent=1 // pred_check
      _
    $region23: #{mlp_actor_sac_forward.1} parent=1 // pred_check_branch
      %45 = sbr.rel (0) target = $region25
    $region24: #{mlp_actor_sac_forward.1} parent=1 // pred_region
      %s47 = ssub.s32 2048, 2048
      %48 = vsyncadd [#allocation5], %s47
      %s49 = sshll.u32 [#allocation6], 4
      %s50 = int_to_ptr.vmem [resolvable:$true] %s49
      %55 = dma.hbm_to_vmem [thread:$0]  %s5, 2048, %s50, [#allocation5], 128, 128, 8
    $region25: #{mlp_actor_sac_forward.1} parent=1 // pred_fallthru
      _
    // Predicated region
    $region26: #{mlp_actor_sac_forward.1} parent=1 // pred_check
      _
    $region27: #{mlp_actor_sac_forward.1} parent=1 // pred_check_branch
      %57 = sbr.rel (0) target = $region29
    $region28: #{mlp_actor_sac_forward.1} parent=1 // pred_region
      _
    $region29: #{mlp_actor_sac_forward.1} parent=1 // pred_fallthru
      _
    // Predicated region
    $region30: #{mlp_actor_sac_forward.1} parent=1 // pred_check
      _
    $region31: #{mlp_actor_sac_forward.1} parent=1 // pred_check_branch
      %59 = sbr.rel (0) target = $region33
    $region32: #{mlp_actor_sac_forward.1} parent=1 // pred_region
      %60 = dma.done [#allocation3], 1024
    $region33: #{mlp_actor_sac_forward.1} parent=1 // pred_fallthru
      _
    // Predicated region
    $region34: #{mlp_actor_sac_forward.1} parent=1 // pred_check
      _
    $region35: #{mlp_actor_sac_forward.1} parent=1 // pred_check_branch
      %62 = sbr.rel (0) target = $region37
    $region36: #{mlp_actor_sac_forward.1} parent=1 // pred_region
      %63 = dma.done [#allocation5], 1024
    $region37: #{mlp_actor_sac_forward.1} parent=1 // pred_fallthru
      _
    // Predicated region
    $region38: #{mlp_actor_sac_forward.1} parent=1 // pred_check
      _
    $region39: #{mlp_actor_sac_forward.1} parent=1 // pred_check_branch
      %65 = sbr.rel (0) target = $region41
    $region40: #{mlp_actor_sac_forward.1} parent=1 // pred_region
      %66 = dma.done [#allocation5], 2048
    $region41: #{mlp_actor_sac_forward.1} parent=1 // pred_fallthru
      _
    %v68 = vld [vmem:[%s0] sm:$0xf]
    %v69 = vld [vmem:[#allocation2] sm:$0xf]
    %v70 = vld [vmem:[#allocation2 + $0x4] sm:$0xf]
    %v71 = vld [vmem:[#allocation2 + $0x8] sm:$0xf]
    %v72 = vld [vmem:[#allocation2 + $0xc] sm:$0xf]
    %v73 = vld [vmem:[#allocation2 + $0x10] sm:$0xf]
    %v74 = vld [vmem:[#allocation2 + $0x14] sm:$0xf]
    %v75 = vld [vmem:[#allocation2 + $0x18] sm:$0xf]
    %v76 = vld [vmem:[#allocation2 + $0x1c] sm:$0xf]
    %v77 = vld [vmem:[#allocation2 + $0x20] sm:$0xf]
    %v78 = vld [vmem:[#allocation2 + $0x24] sm:$0xf]
    %v79 = vld [vmem:[#allocation2 + $0x28] sm:$0xf]
    %v80 = vld [vmem:[#allocation2 + $0x2c] sm:$0xf]
    %v81 = vld [vmem:[#allocation2 + $0x30] sm:$0xf]
    %v82 = vld [vmem:[#allocation2 + $0x34] sm:$0xf]
    %v83 = vld [vmem:[#allocation2 + $0x38] sm:$0xf]
    %v84 = vld [vmem:[#allocation2 + $0x3c] sm:$0xf]
    %v85 = vld [vmem:[%s2] sm:$0x1]
    %v87 = vlaneseq
    %v88 = vshrl.u32 %v87, 7
    %v89 = vsub.s32 0, %v88
    %v90 = vrot.slane %v85, %v89
    %v108 = vunpack.c.l.b16 %v69
    %v109 = vunpack.c.l.b16 %v70
    %v110 = vunpack.c.l.b16 %v71
    %v111 = vunpack.c.l.b16 %v72
    %v112 = vunpack.c.l.b16 %v73
    %v113 = vunpack.c.l.b16 %v74
    %v114 = vunpack.c.l.b16 %v75
    %v115 = vunpack.c.l.b16 %v76
    %v116 = vunpack.c.l.b16 %v77
    %v117 = vunpack.c.l.b16 %v78
    %v118 = vunpack.c.l.b16 %v79
    %v119 = vunpack.c.l.b16 %v80
    %v120 = vunpack.c.l.b16 %v81
    %v121 = vunpack.c.l.b16 %v82
    %v122 = vunpack.c.l.b16 %v83
    %v123 = vunpack.c.l.b16 %v84
    %v124 = vpack.c.b16 %v109, %v108
    %v125 = vpack.c.b16 %v111, %v110
    %v126 = vpack.c.b16 %v113, %v112
    %v127 = vpack.c.b16 %v115, %v114
    %v128 = vpack.c.b16 %v117, %v116
    %v129 = vpack.c.b16 %v119, %v118
    %v130 = vpack.c.b16 %v121, %v120
    %v131 = vpack.c.b16 %v123, %v122
    %140 = vmatprep.subr.bf16.mxu0 0
    %141 = vmatpush1.bf16.msra.mxu0 %v124
    %142 = vmatprep.subr.bf16.mxu0 0
    %143 = vmatpush1.bf16.msra.mxu0 %v125
    %144 = vmatprep.subr.bf16.mxu0 0
    %145 = vmatpush1.bf16.msra.mxu0 %v126
    %146 = vmatprep.subr.bf16.mxu0 0
    %147 = vmatpush1.bf16.msra.mxu0 %v127
    %148 = vmatprep.subr.bf16.mxu0 0
    %149 = vmatpush1.bf16.msra.mxu0 %v128
    %150 = vmatprep.subr.bf16.mxu0 0
    %151 = vmatpush1.bf16.msra.mxu0 %v129
    %152 = vmatprep.subr.bf16.mxu0 0
    %153 = vmatpush1.bf16.msra.mxu0 %v130
    %154 = vmatprep.subr.bf16.mxu0 0
    %155 = vmatpush1.bf16.msra.mxu0 %v131
    %156 = vmatprep.subr.bf16.mxu0 0
    %157 = vmatpush1.bf16.msra.mxu0 0
    %158 = vmatprep.subr.bf16.mxu0 0
    %159 = vmatpush1.bf16.msra.mxu0 0
    %160 = vmatprep.subr.bf16.mxu0 0
    %161 = vmatpush1.bf16.msra.mxu0 0
    %162 = vmatprep.subr.bf16.mxu0 0
    %163 = vmatpush1.bf16.msra.mxu0 0
    %164 = vmatprep.subr.bf16.mxu0 0
    %165 = vmatpush1.bf16.msra.mxu0 0
    %166 = vmatprep.subr.bf16.mxu0 0
    %167 = vmatpush1.bf16.msra.mxu0 0
    %168 = vmatprep.subr.bf16.mxu0 0
    %169 = vmatpush1.bf16.msra.mxu0 0
    %170 = vmatprep.subr.bf16.mxu0 0
    %171 = vmatpush1.bf16.msra.mxu0 0
    %172 = vmatprep.mubr.bf16.mxu0 0
    %173 = vmatmul.mubr.bf16.gmra.mrb[0].mxu0 %v68
    %v174 = vpop.f32.mrb[0].mxu0
    %v175 = vadd.f32 %v90, %v174
    %v176 = vpop.f32.mrb[0].mxu0
    %v177 = vpop.f32.mrb[0].mxu0
    %v178 = vpop.f32.mrb[0].mxu0
    %179 = vdwg.mxu0
    %v180 = vmax.f32 %v175, 0.0
    %v181 = vpack.c.bf16 %v180, %v180
    %v182 = vld [vmem:[#allocation4] sm:$0xf]
    %v183 = vld [vmem:[#allocation4 + $0x4] sm:$0xf]
    %v184 = vld [vmem:[#allocation4 + $0x8] sm:$0xf]
    %v185 = vld [vmem:[#allocation4 + $0xc] sm:$0xf]
    %v186 = vld [vmem:[#allocation4 + $0x10] sm:$0xf]
    %v187 = vld [vmem:[#allocation4 + $0x14] sm:$0xf]
    %v188 = vld [vmem:[#allocation4 + $0x18] sm:$0xf]
    %v189 = vld [vmem:[#allocation4 + $0x1c] sm:$0xf]
    %v190 = vld [vmem:[#allocation4 + $0x20] sm:$0xf]
    %v191 = vld [vmem:[#allocation4 + $0x24] sm:$0xf]
    %v192 = vld [vmem:[#allocation4 + $0x28] sm:$0xf]
    %v193 = vld [vmem:[#allocation4 + $0x2c] sm:$0xf]
    %v194 = vld [vmem:[#allocation4 + $0x30] sm:$0xf]
    %v195 = vld [vmem:[#allocation4 + $0x34] sm:$0xf]
    %v196 = vld [vmem:[#allocation4 + $0x38] sm:$0xf]
    %v197 = vld [vmem:[#allocation4 + $0x3c] sm:$0xf]
    %v198 = vld [vmem:[%s4] sm:$0x1]
    %v200 = vlaneseq
    %v201 = vshrl.u32 %v200, 7
    %v202 = vsub.s32 0, %v201
    %v203 = vrot.slane %v198, %v202
    %v221 = vunpack.c.l.b16 %v182
    %v222 = vunpack.c.l.b16 %v183
    %v223 = vunpack.c.l.b16 %v184
    %v224 = vunpack.c.l.b16 %v185
    %v225 = vunpack.c.l.b16 %v186
    %v226 = vunpack.c.l.b16 %v187
    %v227 = vunpack.c.l.b16 %v188
    %v228 = vunpack.c.l.b16 %v189
    %v229 = vunpack.c.l.b16 %v190
    %v230 = vunpack.c.l.b16 %v191
    %v231 = vunpack.c.l.b16 %v192
    %v232 = vunpack.c.l.b16 %v193
    %v233 = vunpack.c.l.b16 %v194
    %v234 = vunpack.c.l.b16 %v195
    %v235 = vunpack.c.l.b16 %v196
    %v236 = vunpack.c.l.b16 %v197
    %v237 = vpack.c.b16 %v222, %v221
    %v238 = vpack.c.b16 %v224, %v223
    %v239 = vpack.c.b16 %v226, %v225
    %v240 = vpack.c.b16 %v228, %v227
    %v241 = vpack.c.b16 %v230, %v229
    %v242 = vpack.c.b16 %v232, %v231
    %v243 = vpack.c.b16 %v234, %v233
    %v244 = vpack.c.b16 %v236, %v235
    %253 = vmatprep.subr.bf16.mxu0 0
    %254 = vmatpush1.bf16.msra.mxu0 %v237
    %255 = vmatprep.subr.bf16.mxu0 0
    %256 = vmatpush1.bf16.msra.mxu0 %v238
    %257 = vmatprep.subr.bf16.mxu0 0
    %258 = vmatpush1.bf16.msra.mxu0 %v239
    %259 = vmatprep.subr.bf16.mxu0 0
    %260 = vmatpush1.bf16.msra.mxu0 %v240
    %261 = vmatprep.subr.bf16.mxu0 0
    %262 = vmatpush1.bf16.msra.mxu0 %v241
    %263 = vmatprep.subr.bf16.mxu0 0
    %264 = vmatpush1.bf16.msra.mxu0 %v242
    %265 = vmatprep.subr.bf16.mxu0 0
    %266 = vmatpush1.bf16.msra.mxu0 %v243
    %267 = vmatprep.subr.bf16.mxu0 0
    %268 = vmatpush1.bf16.msra.mxu0 %v244
    %269 = vmatprep.subr.bf16.mxu0 0
    %270 = vmatpush1.bf16.msra.mxu0 0
    %271 = vmatprep.subr.bf16.mxu0 0
    %272 = vmatpush1.bf16.msra.mxu0 0
    %273 = vmatprep.subr.bf16.mxu0 0
    %274 = vmatpush1.bf16.msra.mxu0 0
    %275 = vmatprep.subr.bf16.mxu0 0
    %276 = vmatpush1.bf16.msra.mxu0 0
    %277 = vmatprep.subr.bf16.mxu0 0
    %278 = vmatpush1.bf16.msra.mxu0 0
    %279 = vmatprep.subr.bf16.mxu0 0
    %280 = vmatpush1.bf16.msra.mxu0 0
    %281 = vmatprep.subr.bf16.mxu0 0
    %282 = vmatpush1.bf16.msra.mxu0 0
    %283 = vmatprep.subr.bf16.mxu0 0
    %284 = vmatpush1.bf16.msra.mxu0 0
    %285 = vmatprep.mubr.bf16.mxu0 0
    %286 = vmatmul.mubr.bf16.gmra.mrb[0].mxu0 %v181
    %v287 = vpop.f32.mrb[0].mxu0
    %v288 = vadd.f32 %v203, %v287
    %v289 = vpop.f32.mrb[0].mxu0
    %v290 = vpop.f32.mrb[0].mxu0
    %v291 = vpop.f32.mrb[0].mxu0
    %292 = vdwg.mxu0
    %v293 = vmax.f32 %v288, 0.0
    %v294 = vpack.c.bf16 %v293, %v293
    %v295 = vld [vmem:[#allocation6] sm:$0xff]
    %v296 = vld [vmem:[#allocation6 + $0x8] sm:$0xff]
    %v297 = vld [vmem:[#allocation6 + $0x10] sm:$0xff]
    %v298 = vld [vmem:[#allocation6 + $0x18] sm:$0xff]
    %v299 = vld [vmem:[#allocation6 + $0x20] sm:$0xff]
    %v300 = vld [vmem:[#allocation6 + $0x28] sm:$0xff]
    %v301 = vld [vmem:[#allocation6 + $0x30] sm:$0xff]
    %v302 = vld [vmem:[#allocation6 + $0x38] sm:$0xff]
    %v303 = vld [vmem:[#allocation6 + $0x40] sm:$0xff]
    %v304 = vld [vmem:[#allocation6 + $0x48] sm:$0xff]
    %v305 = vld [vmem:[#allocation6 + $0x50] sm:$0xff]
    %v306 = vld [vmem:[#allocation6 + $0x58] sm:$0xff]
    %v307 = vld [vmem:[#allocation6 + $0x60] sm:$0xff]
    %v308 = vld [vmem:[#allocation6 + $0x68] sm:$0xff]
    %v309 = vld [vmem:[#allocation6 + $0x70] sm:$0xff]
    %v310 = vld [vmem:[#allocation6 + $0x78] sm:$0xff]
    %v311 = vld [vmem:[%s6] sm:$0x3]
    %v313 = vlaneseq
    %v314 = vshrl.u32 %v313, 7
    %v315 = vsub.s32 0, %v314
    %v316 = vrot.slane %v311, %v315
    %v317 = vlaneseq
    %v318 = vshrl.u32 %v317, 7
    %v319 = vsub.s32 1, %v318
    %v320 = vrot.slane %v311, %v319
    %v339 = vunpack.c.l.b16 %v295
    %v340 = vunpack.c.h.b16 %v295
    %v341 = vunpack.c.l.b16 %v296
    %v342 = vunpack.c.h.b16 %v296
    %v343 = vunpack.c.l.b16 %v297
    %v344 = vunpack.c.h.b16 %v297
    %v345 = vunpack.c.l.b16 %v298
    %v346 = vunpack.c.h.b16 %v298
    %v347 = vunpack.c.l.b16 %v299
    %v348 = vunpack.c.h.b16 %v299
    %v349 = vunpack.c.l.b16 %v300
    %v350 = vunpack.c.h.b16 %v300
    %v351 = vunpack.c.l.b16 %v301
    %v352 = vunpack.c.h.b16 %v301
    %v353 = vunpack.c.l.b16 %v302
    %v354 = vunpack.c.h.b16 %v302
    %v355 = vunpack.c.l.b16 %v303
    %v356 = vunpack.c.h.b16 %v303
    %v357 = vunpack.c.l.b16 %v304
    %v358 = vunpack.c.h.b16 %v304
    %v359 = vunpack.c.l.b16 %v305
    %v360 = vunpack.c.h.b16 %v305
    %v361 = vunpack.c.l.b16 %v306
    %v362 = vunpack.c.h.b16 %v306
    %v363 = vunpack.c.l.b16 %v307
    %v364 = vunpack.c.h.b16 %v307
    %v365 = vunpack.c.l.b16 %v308
    %v366 = vunpack.c.h.b16 %v308
    %v367 = vunpack.c.l.b16 %v309
    %v368 = vunpack.c.h.b16 %v309
    %v369 = vunpack.c.l.b16 %v310
    %v370 = vunpack.c.h.b16 %v310
    %v371 = vpack.c.b16 %v341, %v339
    %v372 = vpack.c.b16 %v342, %v340
    %v373 = vpack.c.b16 %v345, %v343
    %v374 = vpack.c.b16 %v346, %v344
    %v375 = vpack.c.b16 %v349, %v347
    %v376 = vpack.c.b16 %v350, %v348
    %v377 = vpack.c.b16 %v353, %v351
    %v378 = vpack.c.b16 %v354, %v352
    %v379 = vpack.c.b16 %v357, %v355
    %v380 = vpack.c.b16 %v358, %v356
    %v381 = vpack.c.b16 %v361, %v359
    %v382 = vpack.c.b16 %v362, %v360
    %v383 = vpack.c.b16 %v365, %v363
    %v384 = vpack.c.b16 %v366, %v364
    %v385 = vpack.c.b16 %v369, %v367
    %v386 = vpack.c.b16 %v370, %v368
    %403 = vmatprep.subr.bf16.mxu0 %v372
    %404 = vmatpush1.bf16.msra.mxu0 %v371
    %405 = vmatprep.subr.bf16.mxu0 %v374
    %406 = vmatpush1.bf16.msra.mxu0 %v373
    %407 = vmatprep.subr.bf16.mxu0 %v376
    %408 = vmatpush1.bf16.msra.mxu0 %v375
    %409 = vmatprep.subr.bf16.mxu0 %v378
    %410 = vmatpush1.bf16.msra.mxu0 %v377
    %411 = vmatprep.subr.bf16.mxu0 %v380
    %412 = vmatpush1.bf16.msra.mxu0 %v379
    %413 = vmatprep.subr.bf16.mxu0 %v382
    %414 = vmatpush1.bf16.msra.mxu0 %v381
    %415 = vmatprep.subr.bf16.mxu0 %v384
    %416 = vmatpush1.bf16.msra.mxu0 %v383
    %417 = vmatprep.subr.bf16.mxu0 %v386
    %418 = vmatpush1.bf16.msra.mxu0 %v385
    %419 = vmatprep.subr.bf16.mxu0 0
    %420 = vmatpush1.bf16.msra.mxu0 0
    %421 = vmatprep.subr.bf16.mxu0 0
    %422 = vmatpush1.bf16.msra.mxu0 0
    %423 = vmatprep.subr.bf16.mxu0 0
    %424 = vmatpush1.bf16.msra.mxu0 0
    %425 = vmatprep.subr.bf16.mxu0 0
    %426 = vmatpush1.bf16.msra.mxu0 0
    %427 = vmatprep.subr.bf16.mxu0 0
    %428 = vmatpush1.bf16.msra.mxu0 0
    %429 = vmatprep.subr.bf16.mxu0 0
    %430 = vmatpush1.bf16.msra.mxu0 0
    %431 = vmatprep.subr.bf16.mxu0 0
    %432 = vmatpush1.bf16.msra.mxu0 0
    %433 = vmatprep.subr.bf16.mxu0 0
    %434 = vmatpush1.bf16.msra.mxu0 0
    %435 = vmatprep.mubr.bf16.mxu0 0
    %436 = vmatmul.mubr.bf16.gmra.mrb[0].mxu0 %v294
    %v437 = vpop.f32.mrb[0].mxu0
    %v438 = vadd.f32 %v316, %v437
    %v439 = vpop.f32.mrb[0].mxu0
    %v440 = vadd.f32 %v320, %v439
    %v441 = vpop.f32.mrb[0].mxu0
    %v442 = vpop.f32.mrb[0].mxu0
    %443 = vdwg.mxu0
    %v444 = vlaneseq
    %v445 = vand.u32 %v444, 127
    %v446 = vadd.s32 %v445, 128
    %vm447 = vcmp.ge.s32.totalorder %v445, 128
    %vm448 = vcmp.ge.s32.totalorder %v446, 128
    %v449 = vmax.f32 %v438, -20.0
    %v450 = vmax.f32 %v440, -20.0
    %v451 = vmin.f32 %v449, 2.0
    %v452 = vmin.f32 %v450, 2.0
    %v453 = vsel %vm447, %v451, %v438
    %v454 = vsel %vm448, %v452, %v440
    %v455 = vpack.c.bf16 %v453, %v453
    %v456 = vpack.c.bf16 %v454, %v454
    %v459 = vunpack.c.l.b16 %v455
    %v460 = vunpack.c.l.b16 %v456
    %v461 = vpack.c.b16 %v460, %v459
    %463 = vst [vmem:[%s7] sm:$0xff] %v461
    // Predicated region
    $region42: #{mlp_actor_sac_forward.1} parent=1 // pred_check
      _
    $region43: #{mlp_actor_sac_forward.1} parent=1 // pred_check_branch
      %465 = sbr.rel (0) target = $region45
    $region44: #{mlp_actor_sac_forward.1} parent=1 // pred_region
      _
    $region45: #{mlp_actor_sac_forward.1} parent=1 // pred_fallthru
      _
    // Predicated region
    $region46: #{mlp_actor_sac_forward.1} parent=1 // pred_check
      _
    $region47: #{mlp_actor_sac_forward.1} parent=1 // pred_check_branch
      %467 = sbr.rel (0) target = $region49
    $region48: #{mlp_actor_sac_forward.1} parent=1 // pred_region
      _
    $region49: #{mlp_actor_sac_forward.1} parent=1 // pred_fallthru
      _
    %468 = vsyncpa [#allocation3], 1
    %469 = vsyncpa [#allocation5], 1

</llo_original>
